<compile_context>
chip_gen: v7x
topology: tpu7x:2x2x1
jax: 0.10.0
libtpu: 0.0.40
codegen_flags: <defaults>
</compile_context>

<pallas_src>
import functools

import jax
import jax.numpy as jnp
from jax import lax
from jax.experimental import pallas as pl
from jax.experimental.pallas import tpu as pltpu

LANES = 128
GAMMA = 2.0
_SMALL_PATH_MAX_ELEMS = 1 << 20   # both f32 inputs <= 8 MiB -> fits scoped VMEM on all gens
_GRID_BLOCK_ROWS = 1024           # gridded path: (1024, 128) f32 tile = 0.5 MiB per buffer
_NSPLIT = 2                       # leading parallel grid axis (v7x: one per TensorCore)


def _bce_block(o, t, *, binary_targets):
    """Element-wise clamped BCE on one block; cast to f32 AFTER the VMEM load."""
    o = o.astype(jnp.float32)
    t = t.astype(jnp.float32)
    if binary_targets:
        # Hard labels: select the probability first -> one log per element (EUP is
        # the binding unit here), one fewer max and one fewer mul/add.
        p_t = jnp.where(t >= 0.5, o, 1.0 - o)
        return -jnp.maximum(jnp.log(p_t), -100.0)
    # General soft-target BCELoss (PyTorch clamps each log term at -100).
    log_o = jnp.maximum(jnp.log(o), -100.0)
    log_1mo = jnp.maximum(jnp.log(1.0 - o), -100.0)
    return -(t * log_o + (1.0 - t) * log_1mo)


def _focal_finalize(sum_bce, n_valid):
    """sum(BCE) -> focal loss.  Works on (1,1) arrays (in-kernel) or scalars (wrapper)."""
    mean_bce = sum_bce / jnp.float32(n_valid)
    pt = jnp.exp(-mean_bce)
    one_m_pt = 1.0 - pt
    return one_m_pt * one_m_pt * mean_bce   # gamma == 2 -> explicit square, no pow


def _focal_small_kernel(o_ref, t_ref, out_ref, *, n_valid, binary_targets, needs_mask):
    bce = _bce_block(o_ref[...], t_ref[...], binary_targets=binary_targets)
    if needs_mask:
        rows, lanes = o_ref.shape
        row = lax.broadcasted_iota(jnp.int32, (rows, lanes), 0)
        lane = lax.broadcasted_iota(jnp.int32, (rows, lanes), 1)
        idx = row * lanes + lane
        bce = jnp.where(idx < n_valid, bce, 0.0)
    # Keep the reduce / finalize on a (1,1) array so exp stays on the EUP vector path,
    # then emit the single scalar through SMEM (no padded VMEM tile writeback).
    focal = _focal_finalize(jnp.sum(bce, keepdims=True), n_valid)
    out_ref[0] = focal[0, 0]


def _focal_grid_kernel(o_ref, t_ref, psum_ref, acc_ref, *,
                       n_valid, binary_targets, tiles_per_split):
    t_idx = pl.program_id(1)

    @pl.when(t_idx == 0)
    def _():
        acc_ref[...] = jnp.zeros_like(acc_ref)

    block_rows, lanes = o_ref.shape
    bce = _bce_block(o_ref[...], t_ref[...], binary_targets=binary_targets)

    # Global flat element index of this block's (nominal, unclamped) position.
    # Everything past n_valid (lane padding, partial trailing blocks, clamped
    # duplicate blocks from the parallel split) is masked to exactly 0.
    block_idx = pl.program_id(0) * tiles_per_split + t_idx
    row = lax.broadcasted_iota(jnp.int32, (block_rows, lanes), 0)
    lane = lax.broadcasted_iota(jnp.int32, (block_rows, lanes), 1)
    idx = (block_idx * block_rows + row) * lanes + lane
    bce = jnp.where(idx < n_valid, bce, 0.0)

    acc_ref[...] += jnp.sum(bce, keepdims=True)

    @pl.when(t_idx == pl.num_programs(1) - 1)
    def _():
        psum_ref[...] = acc_ref[...]


def focal_loss(outputs, targets, gamma=2.0, *, binary_targets=False,
               small_path_max_elems=_SMALL_PATH_MAX_ELEMS,
               block_rows=_GRID_BLOCK_ROWS):
    assert gamma == GAMMA, "kernel is specialized for gamma=2"
    n_valid = outputs.size

    # No wrapper-side astype (cast happens in-kernel after the load); pad only to
    # a LANES multiple when the flat->2D reshape requires it (zero pad is masked
    # in-kernel anyway).
    o_flat = outputs.reshape(-1)
    t_flat = targets.reshape(-1)
    n_pad = (-n_valid) % LANES
    if n_pad:
        o_flat = jnp.pad(o_flat, (0, n_pad))
        t_flat = jnp.pad(t_flat, (0, n_pad))
    rows = (n_valid + n_pad) // LANES
    o2 = o_flat.reshape(rows, LANES)
    t2 = t_flat.reshape(rows, LANES)

    logs_per_elem = 1 if binary_targets else 2
    cost = pl.CostEstimate(
        flops=6 * n_valid,
        transcendentals=logs_per_elem * n_valid + 1,
        bytes_accessed=n_valid * (jnp.dtype(outputs.dtype).itemsize
                                  + jnp.dtype(targets.dtype).itemsize) + 4,
    )

    if n_valid <= small_path_max_elems:
        kernel = functools.partial(
            _focal_small_kernel, n_valid=n_valid,
            binary_targets=binary_targets, needs_mask=bool(n_pad))
        out = pl.pallas_call(
            kernel,
            out_shape=jax.ShapeDtypeStruct((1,), jnp.float32),
            in_specs=[
                pl.BlockSpec(memory_space=pltpu.MemorySpace.VMEM),
                pl.BlockSpec(memory_space=pltpu.MemorySpace.VMEM),
            ],
            out_specs=pl.BlockSpec(memory_space=pltpu.MemorySpace.SMEM),
            compiler_params=pltpu.CompilerParams(
                vmem_limit_bytes=32 * 1024 * 1024),   # v5e scoped default is only 16 MiB
            cost_estimate=cost,
        )(o2, t2)
        return out[0]

    # ---- gridded reduction path for large inputs ----
    tiles_total = pl.cdiv(rows, block_rows)
    nsplit = min(_NSPLIT, tiles_total)
    tiles_per_split = pl.cdiv(tiles_total, nsplit)

    def in_map(s, t):
        # Clamp redundant trailing blocks of the parallel split onto the last real
        # block; their contribution is fully masked out via the unclamped index.
        return (jnp.minimum(s * tiles_per_split + t, tiles_total - 1), 0)

    kernel = functools.partial(
        _focal_grid_kernel, n_valid=n_valid,
        binary_targets=binary_targets, tiles_per_split=tiles_per_split)

    psum = pl.pallas_call(
        kernel,
        out_shape=jax.ShapeDtypeStruct((nsplit, 1), jnp.float32),
        grid_spec=pltpu.PrefetchScalarGridSpec(
            num_scalar_prefetch=0,
            grid=(nsplit, tiles_per_split),
            in_specs=[pl.BlockSpec((block_rows, LANES), in_map),
                      pl.BlockSpec((block_rows, LANES), in_map)],
            out_specs=pl.BlockSpec((1, 1), lambda s, t: (s, 0)),
            scratch_shapes=[pltpu.VMEM((1, 1), jnp.float32)],
        ),
        compiler_params=pltpu.CompilerParams(
            dimension_semantics=("parallel", "arbitrary")),
        cost_estimate=cost,
    )(o2, t2)

    # Combine per-split partial sums and apply the scalar focal finalize (3 scalar
    # ops) in the wrapper.
    return _focal_finalize(jnp.sum(psum), n_valid)


def focal_loss_ref(outputs, targets, gamma=2.0):
    o = outputs.astype(jnp.float32)
    t = targets.astype(jnp.float32)
    bce = -(t * jnp.maximum(jnp.log(o), -100.0)
            + (1.0 - t) * jnp.maximum(jnp.log(1.0 - o), -100.0))
    mean_bce = jnp.mean(bce)
    pt = jnp.exp(-mean_bce)
    return (1.0 - pt) ** gamma * mean_bce


if __name__ == "__main__":
    key = jax.random.PRNGKey(0)
    k1, k2, k3, k4, k5 = jax.random.split(key, 5)

    # outputs are probabilities (post-sigmoid), targets are binary labels.
    shape = (2, 4, 16, 16)
    outputs = jax.random.uniform(k1, shape, jnp.float32, minval=1e-4, maxval=1.0 - 1e-4)
    targets = (jax.random.uniform(k2, shape, jnp.float32) > 0.5).astype(jnp.float32)
    ref = focal_loss_ref(outputs, targets)

    # 1) small single-block path, hard-label fast path (one log / element).
    loss_bin = jax.block_until_ready(focal_loss(outputs, targets, binary_targets=True))
    assert jnp.allclose(loss_bin, ref, rtol=1e-5, atol=1e-6), (loss_bin, ref)

    # 2) general soft-target path (two logs), ragged size exercising the in-kernel mask.
    shape_r = (2, 4, 15, 15)   # 1800 elements -> lane padding + mask
    outputs_r = jax.random.uniform(k3, shape_r, jnp.float32, minval=1e-4, maxval=1.0 - 1e-4)
    soft_targets = jax.random.uniform(k4, shape_r, jnp.float32)
    ref_soft = focal_loss_ref(outputs_r, soft_targets)
    loss_soft = jax.block_until_ready(focal_loss(outputs_r, soft_targets))
    assert jnp.allclose(loss_soft, ref_soft, rtol=1e-5, atol=1e-6), (loss_soft, ref_soft)

    # 3) gridded (parallel, arbitrary) reduction path, forced with tiny tiles so the
    #    grid / partial-block masking / per-split partial sums get exercised here.
    targets_r = (jax.random.uniform(k5, shape_r, jnp.float32) > 0.5).astype(jnp.float32)
    ref_grid = focal_loss_ref(outputs_r, targets_r)
    loss_grid = jax.block_until_ready(
        focal_loss(outputs_r, targets_r, binary_targets=True,
                   small_path_max_elems=0, block_rows=8))
    assert jnp.allclose(loss_grid, ref_grid, rtol=1e-5, atol=1e-6), (loss_grid, ref_grid)

    print("KERNEL_OK")
</pallas_src>

<mosaic_0001>
module attributes {stable_mosaic.version = 11 : i64} {
  func.func @_focal_small_kernel(%arg0: memref<16x128xf32, #tpu.memory_space<vmem>>, %arg1: memref<16x128xf32, #tpu.memory_space<vmem>>, %arg2: memref<1xf32, #tpu.memory_space<smem>>) attributes {dimension_semantics = [], scalar_prefetch = 0 : i64, scratch_operands = 0 : i64, tpu.core_type = #tpu.core_type<tc>} {
    %c0 = arith.constant 0 : index
    %c0_0 = arith.constant 0 : index
    %0 = vector.load %arg0[%c0, %c0_0] : memref<16x128xf32, #tpu.memory_space<vmem>>, vector<16x128xf32>
    %c0_1 = arith.constant 0 : index
    %c0_2 = arith.constant 0 : index
    %1 = vector.load %arg1[%c0_1, %c0_2] : memref<16x128xf32, #tpu.memory_space<vmem>>, vector<16x128xf32>
    %cst = arith.constant 5.000000e-01 : f32
    %2 = vector.broadcast %cst : f32 to vector<16x128xf32>
    %3 = arith.cmpf oge, %1, %2 : vector<16x128xf32>
    %cst_3 = arith.constant 1.000000e+00 : f32
    %4 = vector.broadcast %cst_3 : f32 to vector<16x128xf32>
    %5 = arith.subf %4, %0 : vector<16x128xf32>
    %6 = arith.select %3, %0, %5 : vector<16x128xi1>, vector<16x128xf32>
    %7 = math.log %6 : vector<16x128xf32>
    %cst_4 = arith.constant -1.000000e+02 : f32
    %8 = vector.broadcast %cst_4 : f32 to vector<16x128xf32>
    %9 = arith.maximumf %7, %8 : vector<16x128xf32>
    %cst_5 = arith.constant 0.000000e+00 : f32
    %10 = vector.broadcast %cst_5 : f32 to vector<16x128xf32>
    %11 = arith.subf %10, %9 : vector<16x128xf32>
    %12 = vector.shape_cast %11 : vector<16x128xf32> to vector<1x16x128xf32>
    %cst_6 = arith.constant dense<0.000000e+00> : vector<1xf32>
    %13 = vector.multi_reduction <add>, %12, %cst_6 [1, 2] : vector<1x16x128xf32> to vector<1xf32>
    %14 = vector.shape_cast %13 : vector<1xf32> to vector<1x1x1xf32>
    %15 = vector.extract %14[0, 0, 0] : f32 from vector<1x1x1xf32>
    %16 = vector.broadcast %15 : f32 to vector<1x1xf32>
    %cst_7 = arith.constant 2.048000e+03 : f32
    %17 = vector.broadcast %cst_7 : f32 to vector<1x1xf32>
    %18 = arith.divf %16, %17 : vector<1x1xf32>
    %cst_8 = arith.constant 0.000000e+00 : f32
    %19 = vector.broadcast %cst_8 : f32 to vector<1x1xf32>
    %20 = arith.subf %19, %18 : vector<1x1xf32>
    %21 = math.exp %20 : vector<1x1xf32>
    %cst_9 = arith.constant 1.000000e+00 : f32
    %22 = vector.broadcast %cst_9 : f32 to vector<1x1xf32>
    %23 = arith.subf %22, %21 : vector<1x1xf32>
    %24 = arith.mulf %23, %23 : vector<1x1xf32>
    %25 = arith.mulf %24, %18 : vector<1x1xf32>
    %26 = vector.extract %25[0, 0] : f32 from vector<1x1xf32>
    %c0_10 = arith.constant 0 : index
    %27 = memref.load %arg2[%c0_10] : memref<1xf32, #tpu.memory_space<smem>>
    memref.store %26, %arg2[%c0_10] : memref<1xf32, #tpu.memory_space<smem>>
    return
  }
}

</mosaic_0001>

<llo_original>
// kernel: tpu_custom_call.1
$region0: #{tpu_custom_call.1}
  #allocation0 [shape = 'u32[]', space=smem, size = 0x4, offset = 0x4, fixed_abs, tag = 'smem constant byte address 0x4 - core index']
  #allocation1 [shape = 'u32[144,128]{1,0:T(1,128)}', space=vmem, size = 0x12000, scoped, tag = 'internal scratch']
  %s0 = inlined_call_operand.hbm [shape: f32[16,128], index: 0, kind: input, shape index: {}]
  %s1 = inlined_call_operand.hbm [shape: f32[16,128], index: 1, kind: input, shape index: {}]
  %s2 = inlined_call_operand.hbm [shape: f32[1], index: 2, kind: output, shape index: {}]
  %s3 = sld [smem:[#allocation0]]
  $region26: #{tpu_custom_call.1} parent=0
    _
  %s5 = ssub.s32 1, %s3
  %s6 = scalar_select 0, %s5, %s3
  $region1: #{tpu_custom_call.1} parent=0
    #allocation2 [shape = 'u8[8192]{0}', space=vmem, size = 0x2000, scoped, tag = 'input window, operand 0, single buffered']
    #allocation3 [shape = 's32[1]{0}', space=sflag, size = 0x4, scoped, tag = 'scoped memory for tpu_custom_call.1']
    #allocation4 [shape = 's32[1]{0}', space=sflag, size = 0x4, scoped, tag = 'scoped memory for tpu_custom_call.1']
    #allocation5 [shape = 'u8[8192]{0}', space=vmem, size = 0x2000, scoped, tag = 'input window, operand 1, single buffered']
    #allocation6 [shape = 's32[1]{0}', space=sflag, size = 0x4, scoped, tag = 'scoped memory for tpu_custom_call.1']
    #allocation7 [shape = 'u8[512]{0}', space=smem, size = 0x200, scoped, tag = 'output window, operand 0, single buffered']
    %7 = vsyncpa [#allocation3], 0
    %8 = vsyncpa [#allocation6], 0
    %9 = vsyncpa [#allocation4], 0
    // Predicated region
    $region2: #{tpu_custom_call.1} parent=1 // pred_check
      _
    $region3: #{tpu_custom_call.1} parent=1 // pred_check_branch
      %11 = sbr.rel (0) target = $region5
    $region4: #{tpu_custom_call.1} parent=1 // pred_region
      %s13 = ssub.s32 256, 256
      %14 = vsyncadd [#allocation3], %s13
      %s15 = sshll.u32 [#allocation2], 4
      %s16 = int_to_ptr.vmem [resolvable:$true] %s15
      %21 = dma.hbm_to_vmem [thread:$0]  %s0, 256, %s16, [#allocation3], 128, 128, 8
    $region5: #{tpu_custom_call.1} parent=1 // pred_fallthru
      _
    // Predicated region
    $region6: #{tpu_custom_call.1} parent=1 // pred_check
      _
    $region7: #{tpu_custom_call.1} parent=1 // pred_check_branch
      %23 = sbr.rel (0) target = $region9
    $region8: #{tpu_custom_call.1} parent=1 // pred_region
      %s25 = ssub.s32 256, 256
      %26 = vsyncadd [#allocation6], %s25
      %s27 = sshll.u32 [#allocation5], 4
      %s28 = int_to_ptr.vmem [resolvable:$true] %s27
      %33 = dma.hbm_to_vmem [thread:$0]  %s1, 256, %s28, [#allocation6], 128, 128, 8
    $region9: #{tpu_custom_call.1} parent=1 // pred_fallthru
      _
    // Predicated region
    $region10: #{tpu_custom_call.1} parent=1 // pred_check
      _
    $region11: #{tpu_custom_call.1} parent=1 // pred_check_branch
      %35 = sbr.rel (0) target = $region13
    $region12: #{tpu_custom_call.1} parent=1 // pred_region
      %36 = dma.done [#allocation3], 256
    $region13: #{tpu_custom_call.1} parent=1 // pred_fallthru
      _
    // Predicated region
    $region14: #{tpu_custom_call.1} parent=1 // pred_check
      _
    $region15: #{tpu_custom_call.1} parent=1 // pred_check_branch
      %38 = sbr.rel (0) target = $region17
    $region16: #{tpu_custom_call.1} parent=1 // pred_region
      %39 = dma.done [#allocation6], 256
    $region17: #{tpu_custom_call.1} parent=1 // pred_fallthru
      _
    %v40 = vld [vmem:[#allocation2] sm:$0xff]
    %v41 = vld [vmem:[#allocation2 + $0x8] sm:$0xff]
    %v42 = vld [vmem:[#allocation5] sm:$0xff]
    %v43 = vld [vmem:[#allocation5 + $0x8] sm:$0xff]
    %vm44 = vcmp.ge.f32.partialorder %v42, 0.5
    %vm45 = vcmp.ge.f32.partialorder %v43, 0.5
    %v46 = vsub.f32 1.0, %v40
    %v47 = vsub.f32 1.0, %v41
    %v48 = vsel %vm44, %v40, %v46
    %v49 = vsel %vm45, %v41, %v47
    %v50 = vlog2.pop %v48
    %v51 = vmul.f32 %v50, 0.6931472
    %v52 = vlog2.pop %v49
    %v53 = vmul.f32 %v52, 0.6931472
    %v54 = vmax.f32 %v51, -100.0
    %v55 = vmax.f32 %v53, -100.0
    %v56 = vsub.f32 0.0, %v54
    %v57 = vsub.f32 0.0, %v55
    %v58 = vadd.f32 %v56, %v57
    %59 = vadd.xlane.f32.xlu0 %v58
    %v60 = vpop.xlane.xlu0 %59
    %v61 = vrot.slane %v60, 4
    %v62 = vadd.f32 %v60, %v61
    %v63 = vrot.slane %v62, 2
    %v64 = vadd.f32 %v62, %v63
    %v65 = vrot.slane %v64, 1
    %v66 = vadd.f32 %v64, %v65
    %s67 = vtos %v66
    %v68 = vstv %s67
    %v69 = vrcp.pop 2048.0
    %v70 = vmul.f32 %v68, %v69
    %v71 = vsub.f32 0.0, %v70
    %v72 = vmul.f32 %v71, 1.442695
    %v73 = vpow.pop %v72
    %v74 = vsub.f32 1.0, %v73
    %v75 = vmul.f32 %v74, %v74
    %v76 = vmul.f32 %v75, %v70
    %s77 = vtos %v76
    %s78 = scalar_lea.smem [#allocation7], 0
    %79 = sst [smem:[%s78]] %s77
    // Predicated region
    $region18: #{tpu_custom_call.1} parent=1 // pred_check
      _
    $region19: #{tpu_custom_call.1} parent=1 // pred_check_branch
      %81 = sbr.rel (0) target = $region21
    $region20: #{tpu_custom_call.1} parent=1 // pred_region
      %s83 = ssub.s32 16, 16
      %84 = vsyncadd [#allocation4], %s83
      %87 = dma.smem_to_hbm [#allocation7], 16, %s2, [#allocation4]
    $region21: #{tpu_custom_call.1} parent=1 // pred_fallthru
      _
    // Predicated region
    $region22: #{tpu_custom_call.1} parent=1 // pred_check
      _
    $region23: #{tpu_custom_call.1} parent=1 // pred_check_branch
      %89 = sbr.rel (0) target = $region25
    $region24: #{tpu_custom_call.1} parent=1 // pred_region
      %90 = dma.done [#allocation4], 16
    $region25: #{tpu_custom_call.1} parent=1 // pred_fallthru
      _
    %91 = sfence
    %92 = vsyncpa [#allocation3], 1
    %93 = vsyncpa [#allocation6], 1
    %94 = vsyncpa [#allocation4], 1

</llo_original>
